<compile_context>
chip_gen: v7x
topology: tpu7x:2x2x1
jax: 0.10.0
libtpu: 0.0.40
codegen_flags: <defaults>
</compile_context>

<pallas_src>
import math
from functools import partial

import jax
import jax.numpy as jnp
from jax.experimental import pallas as pl
from jax.experimental.pallas import tpu as pltpu


def _round_up(n, m):
    return ((n + m - 1) // m) * m


def _ff_geglu_kernel(x_ref, w1h_ref, w1g_ref, b1h_ref, b1g_ref, w2_ref, b2_ref,
                     o_ref, acc_ref):
    # x_ref:   [tm, dim]        (token tile; constant across the j axis)
    # w1h_ref: [dim, tj]        (hidden-half slice of W1)
    # w1g_ref: [dim, tj]        (gate-half slice of W1)
    # b1h_ref: [1, tj]
    # b1g_ref: [1, tj]
    # w2_ref:  [tj, dim_out]    (matching K-slice of W2)
    # b2_ref:  [1, dim_out]
    # o_ref:   [tm, dim_out]    (same block for every j -> accumulator pattern)
    # acc_ref: [tm, dim_out] f32 VMEM scratch
    j = pl.program_id(1)

    @pl.when(j == 0)
    def _():
        acc_ref[...] = jnp.zeros_like(acc_ref)

    x = x_ref[...]  # native dtype; MXU accumulates in f32 below.

    # Two half-width GEGLU dots (no [tm, 2*inner] temporary, no slicing).
    hidden = jnp.dot(x, w1h_ref[...], preferred_element_type=jnp.float32)
    hidden = hidden + b1h_ref[...].astype(jnp.float32)
    gate = jnp.dot(x, w1g_ref[...], preferred_element_type=jnp.float32)
    gate = gate + b1g_ref[...].astype(jnp.float32)

    # Exact GELU (matches torch.nn.functional.gelu, approximate='none').
    gelu_gate = 0.5 * gate * (1.0 + jax.lax.erf(gate * 0.7071067811865476))
    h = hidden * gelu_gate

    # Partial output projection for this inner-dim block; accumulate in f32.
    acc_ref[...] += jnp.dot(h.astype(w2_ref.dtype), w2_ref[...],
                            preferred_element_type=jnp.float32)

    @pl.when(j == pl.num_programs(1) - 1)
    def _():
        o_ref[...] = (acc_ref[...] + b2_ref[...].astype(jnp.float32)).astype(o_ref.dtype)


def feed_forward_pallas(x, w1, b1, w2, b2, *, token_tile=256, inner_tile=512):
    """x: [B, S, dim]; w1: [dim, 2*inner]; b1: [2*inner]; w2: [inner, dim_out]; b2: [dim_out]."""
    B, S, dim = x.shape
    two_inner = w1.shape[1]
    inner = two_inner // 2
    dim_out = w2.shape[1]

    tokens = B * S
    x2d = x.reshape(tokens, dim)

    # Split the GEGLU projection into hidden / gate halves in the wrapper so the
    # kernel never slices a wide VMEM temporary and the split is lane-aligned.
    w1h = w1[:, :inner]
    w1g = w1[:, inner:]
    b1h = b1[:inner].reshape(1, inner)
    b1g = b1[inner:].reshape(1, inner)
    b2_2d = b2.reshape(1, dim_out)

    # Token tile: multiple of 8 sublanes, as large as requested; pad tokens so
    # arbitrary B*S works (padded rows are discarded after the call).
    tm = min(token_tile, _round_up(tokens, 8))
    tokens_padded = _round_up(tokens, tm)
    if tokens_padded != tokens:
        x2d = jnp.pad(x2d, ((0, tokens_padded - tokens), (0, 0)))

    # Inner (reduction) tile over the GEGLU hidden dimension.
    tj = min(inner_tile, inner)
    if inner % tj != 0:
        tj = math.gcd(inner, tj)  # fallback for odd inner sizes

    grid = (tokens_padded // tm, inner // tj)
    # NOTE: for best v7x (2-TC) utilization, tokens_padded // tm should be >= 2.

    cost = pl.CostEstimate(
        flops=2 * tokens * dim * two_inner + 2 * tokens * inner * dim_out,
        transcendentals=tokens * inner,  # erf per gate element
        bytes_accessed=(x2d.size * x2d.dtype.itemsize
                        + w1.size * w1.dtype.itemsize
                        + b1.size * b1.dtype.itemsize
                        + w2.size * w2.dtype.itemsize
                        + b2.size * b2.dtype.itemsize
                        + tokens_padded * dim_out * x.dtype.itemsize),
    )

    out2d = pl.pallas_call(
        _ff_geglu_kernel,
        out_shape=jax.ShapeDtypeStruct((tokens_padded, dim_out), x.dtype),
        grid_spec=pltpu.PrefetchScalarGridSpec(
            num_scalar_prefetch=0,
            grid=grid,
            in_specs=[
                pl.BlockSpec((tm, dim), lambda i, j: (i, 0)),        # x tile
                pl.BlockSpec((dim, tj), lambda i, j: (0, j)),        # W1 hidden slice
                pl.BlockSpec((dim, tj), lambda i, j: (0, j)),        # W1 gate slice
                pl.BlockSpec((1, tj), lambda i, j: (0, j)),          # b1 hidden slice
                pl.BlockSpec((1, tj), lambda i, j: (0, j)),          # b1 gate slice
                pl.BlockSpec((tj, dim_out), lambda i, j: (j, 0)),    # W2 K-slice
                pl.BlockSpec((1, dim_out), lambda i, j: (0, 0)),     # b2
            ],
            out_specs=pl.BlockSpec((tm, dim_out), lambda i, j: (i, 0)),
            scratch_shapes=[pltpu.VMEM((tm, dim_out), jnp.float32)],
        ),
        compiler_params=pltpu.CompilerParams(
            dimension_semantics=("parallel", "arbitrary"),
        ),
        cost_estimate=cost,
    )(x2d, w1h, w1g, b1h, b1g, w2, b2_2d)

    return out2d[:tokens].reshape(B, S, dim_out)


def feed_forward_ref(x, w1, b1, w2, b2):
    """Pure-JAX reference of the same forward pass (for correctness check)."""
    proj = jnp.einsum("bsd,de->bse", x.astype(jnp.float32), w1.astype(jnp.float32)) + b1
    inner = w2.shape[0]
    hidden, gate = proj[..., :inner], proj[..., inner:]
    h = hidden * (0.5 * gate * (1.0 + jax.lax.erf(gate / jnp.sqrt(2.0))))
    y = jnp.einsum("bse,eo->bso", h, w2.astype(jnp.float32)) + b2
    return y.astype(x.dtype)


if __name__ == "__main__":
    # Module config: FeedForward(dim=32) -> inner_dim = 4*32 = 128, dim_out = 32, geglu, bias=True
    dim = 32
    mult = 4
    inner_dim = dim * mult          # 128
    dim_out = dim                   # 32
    B, S = 2, 64                    # 128 tokens total

    key = jax.random.PRNGKey(0)
    kx, kw1, kb1, kw2, kb2 = jax.random.split(key, 5)

    x = jax.random.normal(kx, (B, S, dim), dtype=jnp.float32)

    # Deterministic parameter init (shapes per GEGLU + final Linear in FeedForward).
    # Stored as [in, out]; equivalent to PyTorch's x @ weight.T with weight [out, in].
    w1 = jax.random.normal(kw1, (dim, 2 * inner_dim), dtype=jnp.float32) * (1.0 / math.sqrt(dim))
    b1 = jax.random.normal(kb1, (2 * inner_dim,), dtype=jnp.float32) * 0.02
    w2 = jax.random.normal(kw2, (inner_dim, dim_out), dtype=jnp.float32) * (1.0 / math.sqrt(inner_dim))
    b2 = jax.random.normal(kb2, (dim_out,), dtype=jnp.float32) * 0.02

    out = feed_forward_pallas(x, w1, b1, w2, b2, token_tile=256, inner_tile=512)
    out = jax.block_until_ready(out)

    ref = feed_forward_ref(x, w1, b1, w2, b2)
    assert out.shape == (B, S, dim_out), out.shape
    assert jnp.allclose(out, ref, atol=1e-4, rtol=1e-4), float(jnp.max(jnp.abs(out - ref)))

    print("KERNEL_OK")
</pallas_src>

<mosaic_0001>
module attributes {stable_mosaic.version = 11 : i64} {
  func.func @_ff_geglu_kernel(%arg0: i32, %arg1: i32, %arg2: memref<128x32xf32, #tpu.memory_space<vmem>>, %arg3: memref<32x128xf32, #tpu.memory_space<vmem>>, %arg4: memref<32x128xf32, #tpu.memory_space<vmem>>, %arg5: memref<1x128xf32, #tpu.memory_space<vmem>>, %arg6: memref<1x128xf32, #tpu.memory_space<vmem>>, %arg7: memref<128x32xf32, #tpu.memory_space<vmem>>, %arg8: memref<1x32xf32, #tpu.memory_space<vmem>>, %arg9: memref<128x32xf32, #tpu.memory_space<vmem>>, %arg10: memref<128x32xf32, #tpu.memory_space<vmem>>) attributes {dimension_semantics = [#tpu.dimension_semantics<parallel>, #tpu.dimension_semantics<arbitrary>], iteration_bounds = array<i64: 1, 1>, scalar_prefetch = 0 : i64, scratch_operands = 1 : i64, tpu.core_type = #tpu.core_type<tc>, window_params = [{transform_indices = @transform_0, window_bounds = array<i64: 128, 32>}, {transform_indices = @transform_1, window_bounds = array<i64: 32, 128>}, {transform_indices = @transform_2, window_bounds = array<i64: 32, 128>}, {transform_indices = @transform_3, window_bounds = array<i64: 1, 128>}, {transform_indices = @transform_4, window_bounds = array<i64: 1, 128>}, {transform_indices = @transform_5, window_bounds = array<i64: 128, 32>}, {pipeline_mode = #tpu.pipeline_mode<synchronous>, transform_indices = @transform_6, window_bounds = array<i64: 1, 32>}, {transform_indices = @transform_7, window_bounds = array<i64: 128, 32>}]} {
    %c0_i32 = arith.constant 0 : i32
    %0 = arith.cmpi eq, %arg1, %c0_i32 : i32
    %1 = arith.extui %0 : i1 to i32
    %c0_i32_0 = arith.constant 0 : i32
    %2 = arith.cmpi ne, %1, %c0_i32_0 : i32
    scf.if %2 {
      %cst_23 = arith.constant 0.000000e+00 : f32
      %31 = vector.broadcast %cst_23 : f32 to vector<128x32xf32>
      %c0_24 = arith.constant 0 : index
      %c0_25 = arith.constant 0 : index
      %32 = vector.load %arg10[%c0_24, %c0_25] : memref<128x32xf32, #tpu.memory_space<vmem>>, vector<128x32xf32>
      tpu.vector_store %arg10[%c0_24, %c0_25], %31 {strides = array<i32>} : memref<128x32xf32, #tpu.memory_space<vmem>>, vector<128x32xf32>,
    } else {
    }
    %c0 = arith.constant 0 : index
    %c0_1 = arith.constant 0 : index
    %3 = vector.load %arg2[%c0, %c0_1] : memref<128x32xf32, #tpu.memory_space<vmem>>, vector<128x32xf32>
    %c0_2 = arith.constant 0 : index
    %c0_3 = arith.constant 0 : index
    %4 = vector.load %arg3[%c0_2, %c0_3] : memref<32x128xf32, #tpu.memory_space<vmem>>, vector<32x128xf32>
    %cst = arith.constant dense<0.000000e+00> : vector<128x128xf32>
    %5 = tpu.matmul %3, %4, %cst {dimension_numbers = #tpu.dot_dimension_numbers<[1], [0], [0], [1], [0, 0, 1, 1], [], []>} : vector<128x32xf32>, vector<32x128xf32>, vector<128x128xf32> -> vector<128x128xf32>
    %c0_4 = arith.constant 0 : index
    %c0_5 = arith.constant 0 : index
    %6 = vector.load %arg5[%c0_4, %c0_5] : memref<1x128xf32, #tpu.memory_space<vmem>>, vector<1x128xf32>
    %7 = vector.broadcast %6 : vector<1x128xf32> to vector<128x128xf32>
    %8 = arith.addf %5, %7 : vector<128x128xf32>
    %c0_6 = arith.constant 0 : index
    %c0_7 = arith.constant 0 : index
    %9 = vector.load %arg4[%c0_6, %c0_7] : memref<32x128xf32, #tpu.memory_space<vmem>>, vector<32x128xf32>
    %cst_8 = arith.constant dense<0.000000e+00> : vector<128x128xf32>
    %10 = tpu.matmul %3, %9, %cst_8 {dimension_numbers = #tpu.dot_dimension_numbers<[1], [0], [0], [1], [0, 0, 1, 1], [], []>} : vector<128x32xf32>, vector<32x128xf32>, vector<128x128xf32> -> vector<128x128xf32>
    %c0_9 = arith.constant 0 : index
    %c0_10 = arith.constant 0 : index
    %11 = vector.load %arg6[%c0_9, %c0_10] : memref<1x128xf32, #tpu.memory_space<vmem>>, vector<1x128xf32>
    %12 = vector.broadcast %11 : vector<1x128xf32> to vector<128x128xf32>
    %13 = arith.addf %10, %12 : vector<128x128xf32>
    %cst_11 = arith.constant 5.000000e-01 : f32
    %14 = vector.broadcast %cst_11 : f32 to vector<128x128xf32>
    %15 = arith.mulf %14, %13 : vector<128x128xf32>
    %cst_12 = arith.constant 0.707106769 : f32
    %16 = vector.broadcast %cst_12 : f32 to vector<128x128xf32>
    %17 = arith.mulf %13, %16 : vector<128x128xf32>
    %18 = math.erf %17 : vector<128x128xf32>
    %cst_13 = arith.constant 1.000000e+00 : f32
    %19 = vector.broadcast %cst_13 : f32 to vector<128x128xf32>
    %20 = arith.addf %19, %18 : vector<128x128xf32>
    %21 = arith.mulf %15, %20 : vector<128x128xf32>
    %22 = arith.mulf %8, %21 : vector<128x128xf32>
    %c0_14 = arith.constant 0 : index
    %c0_15 = arith.constant 0 : index
    %23 = vector.load %arg10[%c0_14, %c0_15] : memref<128x32xf32, #tpu.memory_space<vmem>>, vector<128x32xf32>
    %c0_16 = arith.constant 0 : index
    %c0_17 = arith.constant 0 : index
    %24 = vector.load %arg7[%c0_16, %c0_17] : memref<128x32xf32, #tpu.memory_space<vmem>>, vector<128x32xf32>
    %cst_18 = arith.constant dense<0.000000e+00> : vector<128x32xf32>
    %25 = tpu.matmul %22, %24, %cst_18 {dimension_numbers = #tpu.dot_dimension_numbers<[1], [0], [0], [1], [0, 0, 1, 1], [], []>} : vector<128x128xf32>, vector<128x32xf32>, vector<128x32xf32> -> vector<128x32xf32>
    %26 = arith.addf %23, %25 : vector<128x32xf32>
    %c0_19 = arith.constant 0 : index
    %c0_20 = arith.constant 0 : index
    %27 = vector.load %arg10[%c0_19, %c0_20] : memref<128x32xf32, #tpu.memory_space<vmem>>, vector<128x32xf32>
    tpu.vector_store %arg10[%c0_19, %c0_20], %26 {strides = array<i32>} : memref<128x32xf32, #tpu.memory_space<vmem>>, vector<128x32xf32>,
    %c0_i32_21 = arith.constant 0 : i32
    %28 = arith.cmpi eq, %arg1, %c0_i32_21 : i32
    %29 = arith.extui %28 : i1 to i32
    %c0_i32_22 = arith.constant 0 : i32
    %30 = arith.cmpi ne, %29, %c0_i32_22 : i32
    scf.if %30 {
      %c0_23 = arith.constant 0 : index
      %c0_24 = arith.constant 0 : index
      %31 = vector.load %arg10[%c0_23, %c0_24] : memref<128x32xf32, #tpu.memory_space<vmem>>, vector<128x32xf32>
      %c0_25 = arith.constant 0 : index
      %c0_26 = arith.constant 0 : index
      %32 = vector.load %arg8[%c0_25, %c0_26] : memref<1x32xf32, #tpu.memory_space<vmem>>, vector<1x32xf32>
      %33 = vector.broadcast %32 : vector<1x32xf32> to vector<128x32xf32>
      %34 = arith.addf %31, %33 : vector<128x32xf32>
      %c0_27 = arith.constant 0 : index
      %c0_28 = arith.constant 0 : index
      %35 = vector.load %arg9[%c0_27, %c0_28] : memref<128x32xf32, #tpu.memory_space<vmem>>, vector<128x32xf32>
      tpu.vector_store %arg9[%c0_27, %c0_28], %34 {strides = array<i32>} : memref<128x32xf32, #tpu.memory_space<vmem>>, vector<128x32xf32>,
    } else {
    }
    return
  }
  func.func @transform_0(%arg0: i32, %arg1: i32) -> (i32, i32) {
    %c0_i32 = arith.constant 0 : i32
    %c0_i32_0 = arith.constant 0 : i32
    return %arg0, %c0_i32 : i32, i32
  }
  func.func @transform_1(%arg0: i32, %arg1: i32) -> (i32, i32) {
    %c0_i32 = arith.constant 0 : i32
    %c0_i32_0 = arith.constant 0 : i32
    return %c0_i32, %arg1 : i32, i32
  }
  func.func @transform_2(%arg0: i32, %arg1: i32) -> (i32, i32) {
    %c0_i32 = arith.constant 0 : i32
    %c0_i32_0 = arith.constant 0 : i32
    return %c0_i32, %arg1 : i32, i32
  }
  func.func @transform_3(%arg0: i32, %arg1: i32) -> (i32, i32) {
    %c0_i32 = arith.constant 0 : i32
    %c0_i32_0 = arith.constant 0 : i32
    return %c0_i32, %arg1 : i32, i32
  }
  func.func @transform_4(%arg0: i32, %arg1: i32) -> (i32, i32) {
    %c0_i32 = arith.constant 0 : i32
    %c0_i32_0 = arith.constant 0 : i32
    return %c0_i32, %arg1 : i32, i32
  }
  func.func @transform_5(%arg0: i32, %arg1: i32) -> (i32, i32) {
    %c0_i32 = arith.constant 0 : i32
    %c0_i32_0 = arith.constant 0 : i32
    return %arg1, %c0_i32 : i32, i32
  }
  func.func @transform_6(%arg0: i32, %arg1: i32) -> (i32, i32) {
    %c0_i32 = arith.constant 0 : i32
    %c0_i32_0 = arith.constant 0 : i32
    %c0_i32_1 = arith.constant 0 : i32
    return %c0_i32, %c0_i32_0 : i32, i32
  }
  func.func @transform_7(%arg0: i32, %arg1: i32) -> (i32, i32) {
    %c0_i32 = arith.constant 0 : i32
    %c0_i32_0 = arith.constant 0 : i32
    return %arg0, %c0_i32 : i32, i32
  }
}

</mosaic_0001>

<llo_original>
// kernel: tpu_custom_call.1
$region0: #{tpu_custom_call.1}
  #allocation0 [shape = 'u32[]', space=smem, size = 0x4, offset = 0x4, fixed_abs, tag = 'smem constant byte address 0x4 - core index']
  #allocation1 [shape = 'u32[144,128]{1,0:T(1,128)}', space=vmem, size = 0x12000, scoped, tag = 'internal scratch']
  #allocation2 [shape = 'f32[128,32]{1,0:T(8,128)}', space=vmem, size = 0x10000, scoped, tag = 'scratch operand']
  %s0 = inlined_call_operand.vmem [shape: f32[128,32], index: 0, kind: input, shape index: {}]
  %s1 = inlined_call_operand.vmem [shape: f32[32,128], index: 1, kind: input, shape index: {}]
  %s2 = inlined_call_operand.vmem [shape: f32[32,128], index: 2, kind: input, shape index: {}]
  %s3 = inlined_call_operand.vmem [shape: f32[1,128], index: 3, kind: input, shape index: {}]
  %s4 = inlined_call_operand.vmem [shape: f32[1,128], index: 4, kind: input, shape index: {}]
  %s5 = inlined_call_operand.vmem [shape: f32[128,32], index: 5, kind: input, shape index: {}]
  %s6 = inlined_call_operand.vmem [shape: f32[1,32], index: 6, kind: input, shape index: {}]
  %s7 = inlined_call_operand.vmem [shape: f32[128,32], index: 7, kind: output, shape index: {}]
  %s8 = sld [smem:[#allocation0]]
  $region46: #{tpu_custom_call.1} parent=0
    _
  %s10 = ssub.s32 1, %s8
  %s11 = scalar_select 0, %s10, %s8
  // Predicated region
  $region2: #{tpu_custom_call.1} parent=0 // pred_check
    _
  $region3: #{tpu_custom_call.1} parent=0 // pred_check_branch
    %13 = sbr.rel (0) target = $region5
  $region4: #{tpu_custom_call.1} parent=0 // pred_region
    _
  $region5: #{tpu_custom_call.1} parent=0 // pred_fallthru
    _
  // Predicated region
  $region6: #{tpu_custom_call.1} parent=0 // pred_check
    _
  $region7: #{tpu_custom_call.1} parent=0 // pred_check_branch
    %15 = sbr.rel (0) target = $region9
  $region8: #{tpu_custom_call.1} parent=0 // pred_region
    _
  $region9: #{tpu_custom_call.1} parent=0 // pred_fallthru
    _
  // Predicated region
  $region10: #{tpu_custom_call.1} parent=0 // pred_check
    _
  $region11: #{tpu_custom_call.1} parent=0 // pred_check_branch
    %17 = sbr.rel (0) target = $region13
  $region12: #{tpu_custom_call.1} parent=0 // pred_region
    _
  $region13: #{tpu_custom_call.1} parent=0 // pred_fallthru
    _
  // Predicated region
  $region14: #{tpu_custom_call.1} parent=0 // pred_check
    _
  $region15: #{tpu_custom_call.1} parent=0 // pred_check_branch
    %19 = sbr.rel (0) target = $region17
  $region16: #{tpu_custom_call.1} parent=0 // pred_region
    _
  $region17: #{tpu_custom_call.1} parent=0 // pred_fallthru
    _
  // Predicated region
  $region18: #{tpu_custom_call.1} parent=0 // pred_check
    _
  $region19: #{tpu_custom_call.1} parent=0 // pred_check_branch
    %21 = sbr.rel (0) target = $region21
  $region20: #{tpu_custom_call.1} parent=0 // pred_region
    _
  $region21: #{tpu_custom_call.1} parent=0 // pred_fallthru
    _
  // Predicated region
  $region22: #{tpu_custom_call.1} parent=0 // pred_check
    _
  $region23: #{tpu_custom_call.1} parent=0 // pred_check_branch
    %23 = sbr.rel (0) target = $region25
  $region24: #{tpu_custom_call.1} parent=0 // pred_region
    _
  $region25: #{tpu_custom_call.1} parent=0 // pred_fallthru
    _
  // Predicated region
  $region26: #{tpu_custom_call.1} parent=0 // pred_check
    _
  $region27: #{tpu_custom_call.1} parent=0 // pred_check_branch
    %25 = sbr.rel (0) target = $region29
  $region28: #{tpu_custom_call.1} parent=0 // pred_region
    _
  $region29: #{tpu_custom_call.1} parent=0 // pred_fallthru
    _
  %p26 = scmp.eq.s32.totalorder 0, 0
  // Predicated region
  $region30: #{tpu_custom_call.1} parent=0 // pred_check
    %p27 = pneg %p26
  $region31: #{tpu_custom_call.1} parent=0 // pred_check_branch
    %29 = sbr.rel (%p27) target = $region33
  $region32: #{tpu_custom_call.1} parent=0 // pred_region
    %vm30 = vcmask 261120
    %31 = vst.msk [vmem:[#allocation2] sm:$0xff] %vm30, 0.0
    %32 = vst.msk [vmem:[#allocation2 + $0x8] sm:$0xff] %vm30, 0.0
    %33 = vst.msk [vmem:[#allocation2 + $0x10] sm:$0xff] %vm30, 0.0
    %34 = vst.msk [vmem:[#allocation2 + $0x18] sm:$0xff] %vm30, 0.0
    %35 = vst.msk [vmem:[#allocation2 + $0x20] sm:$0xff] %vm30, 0.0
    %36 = vst.msk [vmem:[#allocation2 + $0x28] sm:$0xff] %vm30, 0.0
    %37 = vst.msk [vmem:[#allocation2 + $0x30] sm:$0xff] %vm30, 0.0
    %38 = vst.msk [vmem:[#allocation2 + $0x38] sm:$0xff] %vm30, 0.0
    %39 = vst.msk [vmem:[#allocation2 + $0x40] sm:$0xff] %vm30, 0.0
    %40 = vst.msk [vmem:[#allocation2 + $0x48] sm:$0xff] %vm30, 0.0
    %41 = vst.msk [vmem:[#allocation2 + $0x50] sm:$0xff] %vm30, 0.0
    %42 = vst.msk [vmem:[#allocation2 + $0x58] sm:$0xff] %vm30, 0.0
    %43 = vst.msk [vmem:[#allocation2 + $0x60] sm:$0xff] %vm30, 0.0
    %44 = vst.msk [vmem:[#allocation2 + $0x68] sm:$0xff] %vm30, 0.0
    %45 = vst.msk [vmem:[#allocation2 + $0x70] sm:$0xff] %vm30, 0.0
    %46 = vst.msk [vmem:[#allocation2 + $0x78] sm:$0xff] %vm30, 0.0
  $region33: #{tpu_custom_call.1} parent=0 // pred_fallthru
    _
  %v47 = vld [vmem:[%s0] sm:$0xff]
  %v48 = vld [vmem:[%s0 + $0x8] sm:$0xff]
  %v49 = vld [vmem:[%s0 + $0x10] sm:$0xff]
  %v50 = vld [vmem:[%s0 + $0x18] sm:$0xff]
  %v51 = vld [vmem:[%s0 + $0x20] sm:$0xff]
  %v52 = vld [vmem:[%s0 + $0x28] sm:$0xff]
  %v53 = vld [vmem:[%s0 + $0x30] sm:$0xff]
  %v54 = vld [vmem:[%s0 + $0x38] sm:$0xff]
  %v55 = vld [vmem:[%s0 + $0x40] sm:$0xff]
  %v56 = vld [vmem:[%s0 + $0x48] sm:$0xff]
  %v57 = vld [vmem:[%s0 + $0x50] sm:$0xff]
  %v58 = vld [vmem:[%s0 + $0x58] sm:$0xff]
  %v59 = vld [vmem:[%s0 + $0x60] sm:$0xff]
  %v60 = vld [vmem:[%s0 + $0x68] sm:$0xff]
  %v61 = vld [vmem:[%s0 + $0x70] sm:$0xff]
  %v62 = vld [vmem:[%s0 + $0x78] sm:$0xff]
  %v63 = vld [vmem:[%s1] sm:$0xff]
  %v64 = vld [vmem:[%s1 + $0x8] sm:$0xff]
  %v65 = vld [vmem:[%s1 + $0x10] sm:$0xff]
  %v66 = vld [vmem:[%s1 + $0x18] sm:$0xff]
  %v67 = vld [vmem:[%s3] sm:$0x1]
  %v69 = vlaneseq
  %v70 = vshrl.u32 %v69, 7
  %v71 = vsub.s32 0, %v70
  %v72 = vrot.slane %v67, %v71
  %vm74 = vcmask 261120
  %v76 = vsel %vm74, %v47, 0
  %v79 = vsel %vm74, %v48, 0
  %v82 = vsel %vm74, %v49, 0
  %v85 = vsel %vm74, %v50, 0
  %v88 = vsel %vm74, %v51, 0
  %v91 = vsel %vm74, %v52, 0
  %v94 = vsel %vm74, %v53, 0
  %v97 = vsel %vm74, %v54, 0
  %v100 = vsel %vm74, %v55, 0
  %v103 = vsel %vm74, %v56, 0
  %v106 = vsel %vm74, %v57, 0
  %v109 = vsel %vm74, %v58, 0
  %v112 = vsel %vm74, %v59, 0
  %v115 = vsel %vm74, %v60, 0
  %v118 = vsel %vm74, %v61, 0
  %v121 = vsel %vm74, %v62, 0
  %123 = vmatprep.subr.mxu0 0.0
  %124 = vmatpush1.msra.mxu0 %v63
  %125 = vmatprep.subr.mxu0 0.0
  %126 = vmatpush1.msra.mxu0 %v64
  %127 = vmatprep.subr.mxu0 0.0
  %128 = vmatpush1.msra.mxu0 %v65
  %129 = vmatprep.subr.mxu0 0.0
  %130 = vmatpush1.msra.mxu0 %v66
  %131 = vmatprep.subr.mxu0 0.0
  %132 = vmatpush1.msra.mxu0 0.0
  %133 = vmatprep.subr.mxu0 0.0
  %134 = vmatpush1.msra.mxu0 0.0
  %135 = vmatprep.subr.mxu0 0.0
  %136 = vmatpush1.msra.mxu0 0.0
  %137 = vmatprep.subr.mxu0 0.0
  %138 = vmatpush1.msra.mxu0 0.0
  %139 = vmatprep.subr.mxu0 0.0
  %140 = vmatpush1.msra.mxu0 0.0
  %141 = vmatprep.subr.mxu0 0.0
  %142 = vmatpush1.msra.mxu0 0.0
  %143 = vmatprep.subr.mxu0 0.0
  %144 = vmatpush1.msra.mxu0 0.0
  %145 = vmatprep.subr.mxu0 0.0
  %146 = vmatpush1.msra.mxu0 0.0
  %147 = vmatprep.subr.mxu0 0.0
  %148 = vmatpush1.msra.mxu0 0.0
  %149 = vmatprep.subr.mxu0 0.0
  %150 = vmatpush1.msra.mxu0 0.0
  %151 = vmatprep.subr.mxu0 0.0
  %152 = vmatpush1.msra.mxu0 0.0
  %153 = vmatprep.subr.mxu0 0.0
  %154 = vmatpush1.msra.mxu0 0.0
  %155 = vmatprep.subr.mxu0 0.0
  %156 = vmatpush1.msra.mxu0 0.0
  %157 = vmatprep.subr.mxu0 0.0
  %158 = vmatpush1.msra.mxu0 0.0
  %159 = vmatprep.subr.mxu0 0.0
  %160 = vmatpush1.msra.mxu0 0.0
  %161 = vmatprep.subr.mxu0 0.0
  %162 = vmatpush1.msra.mxu0 0.0
  %163 = vmatprep.subr.mxu0 0.0
  %164 = vmatpush1.msra.mxu0 0.0
  %165 = vmatprep.subr.mxu0 0.0
  %166 = vmatpush1.msra.mxu0 0.0
  %167 = vmatprep.subr.mxu0 0.0
  %168 = vmatpush1.msra.mxu0 0.0
  %169 = vmatprep.subr.mxu0 0.0
  %170 = vmatpush1.msra.mxu0 0.0
  %171 = vmatprep.subr.mxu0 0.0
  %172 = vmatpush1.msra.mxu0 0.0
  %173 = vmatprep.subr.mxu0 0.0
  %174 = vmatpush1.msra.mxu0 0.0
  %175 = vmatprep.subr.mxu0 0.0
  %176 = vmatpush1.msra.mxu0 0.0
  %177 = vmatprep.subr.mxu0 0.0
  %178 = vmatpush1.msra.mxu0 0.0
  %179 = vmatprep.subr.mxu0 0.0
  %180 = vmatpush1.msra.mxu0 0.0
  %181 = vmatprep.subr.mxu0 0.0
  %182 = vmatpush1.msra.mxu0 0.0
  %183 = vmatprep.subr.mxu0 0.0
  %184 = vmatpush1.msra.mxu0 0.0
  %185 = vmatprep.subr.mxu0 0.0
  %186 = vmatpush1.msra.mxu0 0.0
  %187 = vmatprep.mubr.f32.mxu0 0.0
  %188 = vmatmul.mubr.f32.gmra.mrb[0].mxu0 %v76
  %v189 = vpop.f32.mrb[0].mxu0
  %v190 = vadd.f32 %v72, %v189
  %v191 = vpop.f32.mrb[0].mxu0
  %192 = vmatprep.mubr.f32.mxu0 0.0
  %193 = vmatmul.mubr.f32.gmra.mrb[0].mxu0 %v79
  %v194 = vpop.f32.mrb[0].mxu0
  %v195 = vadd.f32 %v72, %v194
  %v196 = vpop.f32.mrb[0].mxu0
  %197 = vmatprep.mubr.f32.mxu0 0.0
  %198 = vmatmul.mubr.f32.gmra.mrb[0].mxu0 %v82
  %v199 = vpop.f32.mrb[0].mxu0
  %v200 = vadd.f32 %v72, %v199
  %v201 = vpop.f32.mrb[0].mxu0
  %202 = vmatprep.mubr.f32.mxu0 0.0
  %203 = vmatmul.mubr.f32.gmra.mrb[0].mxu0 %v85
  %v204 = vpop.f32.mrb[0].mxu0
  %v205 = vadd.f32 %v72, %v204
  %v206 = vpop.f32.mrb[0].mxu0
  %207 = vmatprep.mubr.f32.mxu0 0.0
  %208 = vmatmul.mubr.f32.gmra.mrb[0].mxu0 %v88
  %v209 = vpop.f32.mrb[0].mxu0
  %v210 = vadd.f32 %v72, %v209
  %v211 = vpop.f32.mrb[0].mxu0
  %212 = vmatprep.mubr.f32.mxu0 0.0
  %213 = vmatmul.mubr.f32.gmra.mrb[0].mxu0 %v91
  %v214 = vpop.f32.mrb[0].mxu0
  %v215 = vadd.f32 %v72, %v214
  %v216 = vpop.f32.mrb[0].mxu0
  %217 = vmatprep.mubr.f32.mxu0 0.0
  %218 = vmatmul.mubr.f32.gmra.mrb[0].mxu0 %v94
  %v219 = vpop.f32.mrb[0].mxu0
  %v220 = vadd.f32 %v72, %v219
  %v221 = vpop.f32.mrb[0].mxu0
  %222 = vmatprep.mubr.f32.mxu0 0.0
  %223 = vmatmul.mubr.f32.gmra.mrb[0].mxu0 %v97
  %v224 = vpop.f32.mrb[0].mxu0
  %v225 = vadd.f32 %v72, %v224
  %v226 = vpop.f32.mrb[0].mxu0
  %227 = vmatprep.mubr.f32.mxu0 0.0
  %228 = vmatmul.mubr.f32.gmra.mrb[0].mxu0 %v100
  %v229 = vpop.f32.mrb[0].mxu0
  %v230 = vadd.f32 %v72, %v229
  %v231 = vpop.f32.mrb[0].mxu0
  %232 = vmatprep.mubr.f32.mxu0 0.0
  %233 = vmatmul.mubr.f32.gmra.mrb[0].mxu0 %v103
  %v234 = vpop.f32.mrb[0].mxu0
  %v235 = vadd.f32 %v72, %v234
  %v236 = vpop.f32.mrb[0].mxu0
  %237 = vmatprep.mubr.f32.mxu0 0.0
  %238 = vmatmul.mubr.f32.gmra.mrb[0].mxu0 %v106
  %v239 = vpop.f32.mrb[0].mxu0
  %v240 = vadd.f32 %v72, %v239
  %v241 = vpop.f32.mrb[0].mxu0
  %242 = vmatprep.mubr.f32.mxu0 0.0
  %243 = vmatmul.mubr.f32.gmra.mrb[0].mxu0 %v109
  %v244 = vpop.f32.mrb[0].mxu0
  %v245 = vadd.f32 %v72, %v244
  %v246 = vpop.f32.mrb[0].mxu0
  %247 = vmatprep.mubr.f32.mxu0 0.0
  %248 = vmatmul.mubr.f32.gmra.mrb[0].mxu0 %v112
  %v249 = vpop.f32.mrb[0].mxu0
  %v250 = vadd.f32 %v72, %v249
  %v251 = vpop.f32.mrb[0].mxu0
  %252 = vmatprep.mubr.f32.mxu0 0.0
  %253 = vmatmul.mubr.f32.gmra.mrb[0].mxu0 %v115
  %v254 = vpop.f32.mrb[0].mxu0
  %v255 = vadd.f32 %v72, %v254
  %v256 = vpop.f32.mrb[0].mxu0
  %257 = vmatprep.mubr.f32.mxu0 0.0
  %258 = vmatmul.mubr.f32.gmra.mrb[0].mxu0 %v118
  %v259 = vpop.f32.mrb[0].mxu0
  %v260 = vadd.f32 %v72, %v259
  %v261 = vpop.f32.mrb[0].mxu0
  %262 = vmatprep.mubr.f32.mxu0 0.0
  %263 = vmatmul.mubr.f32.gmra.mrb[0].mxu0 %v121
  %v264 = vpop.f32.mrb[0].mxu0
  %v265 = vadd.f32 %v72, %v264
  %v266 = vpop.f32.mrb[0].mxu0
  %267 = vdwg.mxu0
  %v268 = vld [vmem:[%s2] sm:$0xff]
  %v269 = vld [vmem:[%s2 + $0x8] sm:$0xff]
  %v270 = vld [vmem:[%s2 + $0x10] sm:$0xff]
  %v271 = vld [vmem:[%s2 + $0x18] sm:$0xff]
  %v272 = vld [vmem:[%s4] sm:$0x1]
  %v274 = vlaneseq
  %v275 = vshrl.u32 %v274, 7
  %v276 = vsub.s32 0, %v275
  %v277 = vrot.slane %v272, %v276
  %279 = vmatprep.subr.mxu0 0.0
  %280 = vmatpush1.msra.mxu0 %v268
  %281 = vmatprep.subr.mxu0 0.0
  %282 = vmatpush1.msra.mxu0 %v269
  %283 = vmatprep.subr.mxu0 0.0
  %284 = vmatpush1.msra.mxu0 %v270
  %285 = vmatprep.subr.mxu0 0.0
  %286 = vmatpush1.msra.mxu0 %v271
  %287 = vmatprep.subr.mxu0 0.0
  %288 = vmatpush1.msra.mxu0 0.0
  %289 = vmatprep.subr.mxu0 0.0
  %290 = vmatpush1.msra.mxu0 0.0
  %291 = vmatprep.subr.mxu0 0.0
  %292 = vmatpush1.msra.mxu0 0.0
  %293 = vmatprep.subr.mxu0 0.0
  %294 = vmatpush1.msra.mxu0 0.0
  %295 = vmatprep.subr.mxu0 0.0
  %296 = vmatpush1.msra.mxu0 0.0
  %297 = vmatprep.subr.mxu0 0.0
  %298 = vmatpush1.msra.mxu0 0.0
  %299 = vmatprep.subr.mxu0 0.0
  %300 = vmatpush1.msra.mxu0 0.0
  %301 = vmatprep.subr.mxu0 0.0
  %302 = vmatpush1.msra.mxu0 0.0
  %303 = vmatprep.subr.mxu0 0.0
  %304 = vmatpush1.msra.mxu0 0.0
  %305 = vmatprep.subr.mxu0 0.0
  %306 = vmatpush1.msra.mxu0 0.0
  %307 = vmatprep.subr.mxu0 0.0
  %308 = vmatpush1.msra.mxu0 0.0
  %309 = vmatprep.subr.mxu0 0.0
  %310 = vmatpush1.msra.mxu0 0.0
  %311 = vmatprep.subr.mxu0 0.0
  %312 = vmatpush1.msra.mxu0 0.0
  %313 = vmatprep.subr.mxu0 0.0
  %314 = vmatpush1.msra.mxu0 0.0
  %315 = vmatprep.subr.mxu0 0.0
  %316 = vmatpush1.msra.mxu0 0.0
  %317 = vmatprep.subr.mxu0 0.0
  %318 = vmatpush1.msra.mxu0 0.0
  %319 = vmatprep.subr.mxu0 0.0
  %320 = vmatpush1.msra.mxu0 0.0
  %321 = vmatprep.subr.mxu0 0.0
  %322 = vmatpush1.msra.mxu0 0.0
  %323 = vmatprep.subr.mxu0 0.0
  %324 = vmatpush1.msra.mxu0 0.0
  %325 = vmatprep.subr.mxu0 0.0
  %326 = vmatpush1.msra.mxu0 0.0
  %327 = vmatprep.subr.mxu0 0.0
  %328 = vmatpush1.msra.mxu0 0.0
  %329 = vmatprep.subr.mxu0 0.0
  %330 = vmatpush1.msra.mxu0 0.0
  %331 = vmatprep.subr.mxu0 0.0
  %332 = vmatpush1.msra.mxu0 0.0
  %333 = vmatprep.subr.mxu0 0.0
  %334 = vmatpush1.msra.mxu0 0.0
  %335 = vmatprep.subr.mxu0 0.0
  %336 = vmatpush1.msra.mxu0 0.0
  %337 = vmatprep.subr.mxu0 0.0
  %338 = vmatpush1.msra.mxu0 0.0
  %339 = vmatprep.subr.mxu0 0.0
  %340 = vmatpush1.msra.mxu0 0.0
  %341 = vmatprep.subr.mxu0 0.0
  %342 = vmatpush1.msra.mxu0 0.0
  %343 = vmatprep.mubr.f32.mxu0 0.0
  %344 = vmatmul.mubr.f32.gmra.mrb[0].mxu0 %v76
  %v345 = vpop.f32.mrb[0].mxu0
  %v346 = vadd.f32 %v277, %v345
  %v347 = vpop.f32.mrb[0].mxu0
  %348 = vmatprep.mubr.f32.mxu0 0.0
  %349 = vmatmul.mubr.f32.gmra.mrb[0].mxu0 %v79
  %v350 = vpop.f32.mrb[0].mxu0
  %v351 = vadd.f32 %v277, %v350
  %v352 = vpop.f32.mrb[0].mxu0
  %353 = vmatprep.mubr.f32.mxu0 0.0
  %354 = vmatmul.mubr.f32.gmra.mrb[0].mxu0 %v82
  %v355 = vpop.f32.mrb[0].mxu0
  %v356 = vadd.f32 %v277, %v355
  %v357 = vpop.f32.mrb[0].mxu0
  %358 = vmatprep.mubr.f32.mxu0 0.0
  %359 = vmatmul.mubr.f32.gmra.mrb[0].mxu0 %v85
  %v360 = vpop.f32.mrb[0].mxu0
  %v361 = vadd.f32 %v277, %v360
  %v362 = vpop.f32.mrb[0].mxu0
  %363 = vmatprep.mubr.f32.mxu0 0.0
  %364 = vmatmul.mubr.f32.gmra.mrb[0].mxu0 %v88
  %v365 = vpop.f32.mrb[0].mxu0
  %v366 = vadd.f32 %v277, %v365
  %v367 = vpop.f32.mrb[0].mxu0
  %368 = vmatprep.mubr.f32.mxu0 0.0
  %369 = vmatmul.mubr.f32.gmra.mrb[0].mxu0 %v91
  %v370 = vpop.f32.mrb[0].mxu0
  %v371 = vadd.f32 %v277, %v370
  %v372 = vpop.f32.mrb[0].mxu0
  %373 = vmatprep.mubr.f32.mxu0 0.0
  %374 = vmatmul.mubr.f32.gmra.mrb[0].mxu0 %v94
  %v375 = vpop.f32.mrb[0].mxu0
  %v376 = vadd.f32 %v277, %v375
  %v377 = vpop.f32.mrb[0].mxu0
  %378 = vmatprep.mubr.f32.mxu0 0.0
  %379 = vmatmul.mubr.f32.gmra.mrb[0].mxu0 %v97
  %v380 = vpop.f32.mrb[0].mxu0
  %v381 = vadd.f32 %v277, %v380
  %v382 = vpop.f32.mrb[0].mxu0
  %383 = vmatprep.mubr.f32.mxu0 0.0
  %384 = vmatmul.mubr.f32.gmra.mrb[0].mxu0 %v100
  %v385 = vpop.f32.mrb[0].mxu0
  %v386 = vadd.f32 %v277, %v385
  %v387 = vpop.f32.mrb[0].mxu0
  %388 = vmatprep.mubr.f32.mxu0 0.0
  %389 = vmatmul.mubr.f32.gmra.mrb[0].mxu0 %v103
  %v390 = vpop.f32.mrb[0].mxu0
  %v391 = vadd.f32 %v277, %v390
  %v392 = vpop.f32.mrb[0].mxu0
  %393 = vmatprep.mubr.f32.mxu0 0.0
  %394 = vmatmul.mubr.f32.gmra.mrb[0].mxu0 %v106
  %v395 = vpop.f32.mrb[0].mxu0
  %v396 = vadd.f32 %v277, %v395
  %v397 = vpop.f32.mrb[0].mxu0
  %398 = vmatprep.mubr.f32.mxu0 0.0
  %399 = vmatmul.mubr.f32.gmra.mrb[0].mxu0 %v109
  %v400 = vpop.f32.mrb[0].mxu0
  %v401 = vadd.f32 %v277, %v400
  %v402 = vpop.f32.mrb[0].mxu0
  %403 = vmatprep.mubr.f32.mxu0 0.0
  %404 = vmatmul.mubr.f32.gmra.mrb[0].mxu0 %v112
  %v405 = vpop.f32.mrb[0].mxu0
  %v406 = vadd.f32 %v277, %v405
  %v407 = vpop.f32.mrb[0].mxu0
  %408 = vmatprep.mubr.f32.mxu0 0.0
  %409 = vmatmul.mubr.f32.gmra.mrb[0].mxu0 %v115
  %v410 = vpop.f32.mrb[0].mxu0
  %v411 = vadd.f32 %v277, %v410
  %v412 = vpop.f32.mrb[0].mxu0
  %413 = vmatprep.mubr.f32.mxu0 0.0
  %414 = vmatmul.mubr.f32.gmra.mrb[0].mxu0 %v118
  %v415 = vpop.f32.mrb[0].mxu0
  %v416 = vadd.f32 %v277, %v415
  %v417 = vpop.f32.mrb[0].mxu0
  %418 = vmatprep.mubr.f32.mxu0 0.0
  %419 = vmatmul.mubr.f32.gmra.mrb[0].mxu0 %v121
  %v420 = vpop.f32.mrb[0].mxu0
  %v421 = vadd.f32 %v277, %v420
  %v422 = vpop.f32.mrb[0].mxu0
  %423 = vdwg.mxu0
  %v424 = vmul.f32 %v346, 0.5
  %v425 = vmul.f32 %v351, 0.5
  %v426 = vmul.f32 %v356, 0.5
  %v427 = vmul.f32 %v361, 0.5
  %v428 = vmul.f32 %v366, 0.5
  %v429 = vmul.f32 %v371, 0.5
  %v430 = vmul.f32 %v376, 0.5
  %v431 = vmul.f32 %v381, 0.5
  %v432 = vmul.f32 %v386, 0.5
  %v433 = vmul.f32 %v391, 0.5
  %v434 = vmul.f32 %v396, 0.5
  %v435 = vmul.f32 %v401, 0.5
  %v436 = vmul.f32 %v406, 0.5
  %v437 = vmul.f32 %v411, 0.5
  %v438 = vmul.f32 %v416, 0.5
  %v439 = vmul.f32 %v421, 0.5
  %v440 = vmul.f32 %v346, 0.70710677
  %v441 = vmul.f32 %v351, 0.70710677
  %v442 = vmul.f32 %v356, 0.70710677
  %v443 = vmul.f32 %v361, 0.70710677
  %v444 = vmul.f32 %v366, 0.70710677
  %v445 = vmul.f32 %v371, 0.70710677
  %v446 = vmul.f32 %v376, 0.70710677
  %v447 = vmul.f32 %v381, 0.70710677
  %v448 = vmul.f32 %v386, 0.70710677
  %v449 = vmul.f32 %v391, 0.70710677
  %v450 = vmul.f32 %v396, 0.70710677
  %v451 = vmul.f32 %v401, 0.70710677
  %v452 = vmul.f32 %v406, 0.70710677
  %v453 = vmul.f32 %v411, 0.70710677
  %v454 = vmul.f32 %v416, 0.70710677
  %v455 = vmul.f32 %v421, 0.70710677
  %v456 = verf.f32.pop %v440
  %v457 = verf.f32.pop %v441
  %v458 = verf.f32.pop %v442
  %v459 = verf.f32.pop %v443
  %v460 = verf.f32.pop %v444
  %v461 = verf.f32.pop %v445
  %v462 = verf.f32.pop %v446
  %v463 = verf.f32.pop %v447
  %v464 = verf.f32.pop %v448
  %v465 = verf.f32.pop %v449
  %v466 = verf.f32.pop %v450
  %v467 = verf.f32.pop %v451
  %v468 = verf.f32.pop %v452
  %v469 = verf.f32.pop %v453
  %v470 = verf.f32.pop %v454
  %v471 = verf.f32.pop %v455
  %v472 = vadd.f32 %v456, 1.0
  %v473 = vadd.f32 %v457, 1.0
  %v474 = vadd.f32 %v458, 1.0
  %v475 = vadd.f32 %v459, 1.0
  %v476 = vadd.f32 %v460, 1.0
  %v477 = vadd.f32 %v461, 1.0
  %v478 = vadd.f32 %v462, 1.0
  %v479 = vadd.f32 %v463, 1.0
  %v480 = vadd.f32 %v464, 1.0
  %v481 = vadd.f32 %v465, 1.0
  %v482 = vadd.f32 %v466, 1.0
  %v483 = vadd.f32 %v467, 1.0
  %v484 = vadd.f32 %v468, 1.0
  %v485 = vadd.f32 %v469, 1.0
  %v486 = vadd.f32 %v470, 1.0
  %v487 = vadd.f32 %v471, 1.0
  %v488 = vmul.f32 %v424, %v472
  %v489 = vmul.f32 %v425, %v473
  %v490 = vmul.f32 %v426, %v474
  %v491 = vmul.f32 %v427, %v475
  %v492 = vmul.f32 %v428, %v476
  %v493 = vmul.f32 %v429, %v477
  %v494 = vmul.f32 %v430, %v478
  %v495 = vmul.f32 %v431, %v479
  %v496 = vmul.f32 %v432, %v480
  %v497 = vmul.f32 %v433, %v481
  %v498 = vmul.f32 %v434, %v482
  %v499 = vmul.f32 %v435, %v483
  %v500 = vmul.f32 %v436, %v484
  %v501 = vmul.f32 %v437, %v485
  %v502 = vmul.f32 %v438, %v486
  %v503 = vmul.f32 %v439, %v487
  %v504 = vmul.f32 %v190, %v488
  %v505 = vmul.f32 %v195, %v489
  %v506 = vmul.f32 %v200, %v490
  %v507 = vmul.f32 %v205, %v491
  %v508 = vmul.f32 %v210, %v492
  %v509 = vmul.f32 %v215, %v493
  %v510 = vmul.f32 %v220, %v494
  %v511 = vmul.f32 %v225, %v495
  %v512 = vmul.f32 %v230, %v496
  %v513 = vmul.f32 %v235, %v497
  %v514 = vmul.f32 %v240, %v498
  %v515 = vmul.f32 %v245, %v499
  %v516 = vmul.f32 %v250, %v500
  %v517 = vmul.f32 %v255, %v501
  %v518 = vmul.f32 %v260, %v502
  %v519 = vmul.f32 %v265, %v503
  %v520 = vld [vmem:[#allocation2] sm:$0xff]
  %v521 = vld [vmem:[#allocation2 + $0x8] sm:$0xff]
  %v522 = vld [vmem:[#allocation2 + $0x10] sm:$0xff]
  %v523 = vld [vmem:[#allocation2 + $0x18] sm:$0xff]
  %v524 = vld [vmem:[#allocation2 + $0x20] sm:$0xff]
  %v525 = vld [vmem:[#allocation2 + $0x28] sm:$0xff]
  %v526 = vld [vmem:[#allocation2 + $0x30] sm:$0xff]
  %v527 = vld [vmem:[#allocation2 + $0x38] sm:$0xff]
  %v528 = vld [vmem:[#allocation2 + $0x40] sm:$0xff]
  %v529 = vld [vmem:[#allocation2 + $0x48] sm:$0xff]
  %v530 = vld [vmem:[#allocation2 + $0x50] sm:$0xff]
  %v531 = vld [vmem:[#allocation2 + $0x58] sm:$0xff]
  %v532 = vld [vmem:[#allocation2 + $0x60] sm:$0xff]
  %v533 = vld [vmem:[#allocation2 + $0x68] sm:$0xff]
  %v534 = vld [vmem:[#allocation2 + $0x70] sm:$0xff]
  %v535 = vld [vmem:[#allocation2 + $0x78] sm:$0xff]
  %v536 = vld [vmem:[%s5] sm:$0xff]
  %v537 = vld [vmem:[%s5 + $0x8] sm:$0xff]
  %v538 = vld [vmem:[%s5 + $0x10] sm:$0xff]
  %v539 = vld [vmem:[%s5 + $0x18] sm:$0xff]
  %v540 = vld [vmem:[%s5 + $0x20] sm:$0xff]
  %v541 = vld [vmem:[%s5 + $0x28] sm:$0xff]
  %v542 = vld [vmem:[%s5 + $0x30] sm:$0xff]
  %v543 = vld [vmem:[%s5 + $0x38] sm:$0xff]
  %v544 = vld [vmem:[%s5 + $0x40] sm:$0xff]
  %v545 = vld [vmem:[%s5 + $0x48] sm:$0xff]
  %v546 = vld [vmem:[%s5 + $0x50] sm:$0xff]
  %v547 = vld [vmem:[%s5 + $0x58] sm:$0xff]
  %v548 = vld [vmem:[%s5 + $0x60] sm:$0xff]
  %v549 = vld [vmem:[%s5 + $0x68] sm:$0xff]
  %v550 = vld [vmem:[%s5 + $0x70] sm:$0xff]
  %v551 = vld [vmem:[%s5 + $0x78] sm:$0xff]
  %552 = vmatprep.subr.mxu0 0.0
  %553 = vmatpush1.msra.mxu0 %v536
  %554 = vmatprep.subr.mxu0 0.0
  %555 = vmatpush1.msra.mxu0 %v537
  %556 = vmatprep.subr.mxu0 0.0
  %557 = vmatpush1.msra.mxu0 %v538
  %558 = vmatprep.subr.mxu0 0.0
  %559 = vmatpush1.msra.mxu0 %v539
  %560 = vmatprep.subr.mxu0 0.0
  %561 = vmatpush1.msra.mxu0 %v540
  %562 = vmatprep.subr.mxu0 0.0
  %563 = vmatpush1.msra.mxu0 %v541
  %564 = vmatprep.subr.mxu0 0.0
  %565 = vmatpush1.msra.mxu0 %v542
  %566 = vmatprep.subr.mxu0 0.0
  %567 = vmatpush1.msra.mxu0 %v543
  %568 = vmatprep.subr.mxu0 0.0
  %569 = vmatpush1.msra.mxu0 %v544
  %570 = vmatprep.subr.mxu0 0.0
  %571 = vmatpush1.msra.mxu0 %v545
  %572 = vmatprep.subr.mxu0 0.0
  %573 = vmatpush1.msra.mxu0 %v546
  %574 = vmatprep.subr.mxu0 0.0
  %575 = vmatpush1.msra.mxu0 %v547
  %576 = vmatprep.subr.mxu0 0.0
  %577 = vmatpush1.msra.mxu0 %v548
  %578 = vmatprep.subr.mxu0 0.0
  %579 = vmatpush1.msra.mxu0 %v549
  %580 = vmatprep.subr.mxu0 0.0
  %581 = vmatpush1.msra.mxu0 %v550
  %582 = vmatprep.subr.mxu0 0.0
  %583 = vmatpush1.msra.mxu0 %v551
  %584 = vmatprep.subr.mxu0 0.0
  %585 = vmatpush1.msra.mxu0 0.0
  %586 = vmatprep.subr.mxu0 0.0
  %587 = vmatpush1.msra.mxu0 0.0
  %588 = vmatprep.subr.mxu0 0.0
  %589 = vmatpush1.msra.mxu0 0.0
  %590 = vmatprep.subr.mxu0 0.0
  %591 = vmatpush1.msra.mxu0 0.0
  %592 = vmatprep.subr.mxu0 0.0
  %593 = vmatpush1.msra.mxu0 0.0
  %594 = vmatprep.subr.mxu0 0.0
  %595 = vmatpush1.msra.mxu0 0.0
  %596 = vmatprep.subr.mxu0 0.0
  %597 = vmatpush1.msra.mxu0 0.0
  %598 = vmatprep.subr.mxu0 0.0
  %599 = vmatpush1.msra.mxu0 0.0
  %600 = vmatprep.subr.mxu0 0.0
  %601 = vmatpush1.msra.mxu0 0.0
  %602 = vmatprep.subr.mxu0 0.0
  %603 = vmatpush1.msra.mxu0 0.0
  %604 = vmatprep.subr.mxu0 0.0
  %605 = vmatpush1.msra.mxu0 0.0
  %606 = vmatprep.subr.mxu0 0.0
  %607 = vmatpush1.msra.mxu0 0.0
  %608 = vmatprep.subr.mxu0 0.0
  %609 = vmatpush1.msra.mxu0 0.0
  %610 = vmatprep.subr.mxu0 0.0
  %611 = vmatpush1.msra.mxu0 0.0
  %612 = vmatprep.subr.mxu0 0.0
  %613 = vmatpush1.msra.mxu0 0.0
  %614 = vmatprep.subr.mxu0 0.0
  %615 = vmatpush1.msra.mxu0 0.0
  %616 = vmatprep.mubr.f32.mxu0 0.0
  %617 = vmatmul.mubr.f32.gmra.mrb[0].mxu0 %v504
  %v618 = vpop.f32.mrb[0].mxu0
  %v619 = vadd.f32 0.0, %v618
  %v620 = vpop.f32.mrb[0].mxu0
  %621 = vmatprep.mubr.f32.mxu0 0.0
  %622 = vmatmul.mubr.f32.gmra.mrb[0].mxu0 %v505
  %v623 = vpop.f32.mrb[0].mxu0
  %v624 = vadd.f32 0.0, %v623
  %v625 = vpop.f32.mrb[0].mxu0
  %626 = vmatprep.mubr.f32.mxu0 0.0
  %627 = vmatmul.mubr.f32.gmra.mrb[0].mxu0 %v506
  %v628 = vpop.f32.mrb[0].mxu0
  %v629 = vadd.f32 0.0, %v628
  %v630 = vpop.f32.mrb[0].mxu0
  %631 = vmatprep.mubr.f32.mxu0 0.0
  %632 = vmatmul.mubr.f32.gmra.mrb[0].mxu0 %v507
  %v633 = vpop.f32.mrb[0].mxu0
  %v634 = vadd.f32 0.0, %v633
  %v635 = vpop.f32.mrb[0].mxu0
  %636 = vmatprep.mubr.f32.mxu0 0.0
  %637 = vmatmul.mubr.f32.gmra.mrb[0].mxu0 %v508
  %v638 = vpop.f32.mrb[0].mxu0
  %v639 = vadd.f32 0.0, %v638
  %v640 = vpop.f32.mrb[0].mxu0
  %641 = vmatprep.mubr.f32.mxu0 0.0
  %642 = vmatmul.mubr.f32.gmra.mrb[0].mxu0 %v509
  %v643 = vpop.f32.mrb[0].mxu0
  %v644 = vadd.f32 0.0, %v643
  %v645 = vpop.f32.mrb[0].mxu0
  %646 = vmatprep.mubr.f32.mxu0 0.0
  %647 = vmatmul.mubr.f32.gmra.mrb[0].mxu0 %v510
  %v648 = vpop.f32.mrb[0].mxu0
  %v649 = vadd.f32 0.0, %v648
  %v650 = vpop.f32.mrb[0].mxu0
  %651 = vmatprep.mubr.f32.mxu0 0.0
  %652 = vmatmul.mubr.f32.gmra.mrb[0].mxu0 %v511
  %v653 = vpop.f32.mrb[0].mxu0
  %v654 = vadd.f32 0.0, %v653
  %v655 = vpop.f32.mrb[0].mxu0
  %656 = vmatprep.mubr.f32.mxu0 0.0
  %657 = vmatmul.mubr.f32.gmra.mrb[0].mxu0 %v512
  %v658 = vpop.f32.mrb[0].mxu0
  %v659 = vadd.f32 0.0, %v658
  %v660 = vpop.f32.mrb[0].mxu0
  %661 = vmatprep.mubr.f32.mxu0 0.0
  %662 = vmatmul.mubr.f32.gmra.mrb[0].mxu0 %v513
  %v663 = vpop.f32.mrb[0].mxu0
  %v664 = vadd.f32 0.0, %v663
  %v665 = vpop.f32.mrb[0].mxu0
  %666 = vmatprep.mubr.f32.mxu0 0.0
  %667 = vmatmul.mubr.f32.gmra.mrb[0].mxu0 %v514
  %v668 = vpop.f32.mrb[0].mxu0
  %v669 = vadd.f32 0.0, %v668
  %v670 = vpop.f32.mrb[0].mxu0
  %671 = vmatprep.mubr.f32.mxu0 0.0
  %672 = vmatmul.mubr.f32.gmra.mrb[0].mxu0 %v515
  %v673 = vpop.f32.mrb[0].mxu0
  %v674 = vadd.f32 0.0, %v673
  %v675 = vpop.f32.mrb[0].mxu0
  %676 = vmatprep.mubr.f32.mxu0 0.0
  %677 = vmatmul.mubr.f32.gmra.mrb[0].mxu0 %v516
  %v678 = vpop.f32.mrb[0].mxu0
  %v679 = vadd.f32 0.0, %v678
  %v680 = vpop.f32.mrb[0].mxu0
  %681 = vmatprep.mubr.f32.mxu0 0.0
  %682 = vmatmul.mubr.f32.gmra.mrb[0].mxu0 %v517
  %v683 = vpop.f32.mrb[0].mxu0
  %v684 = vadd.f32 0.0, %v683
  %v685 = vpop.f32.mrb[0].mxu0
  %686 = vmatprep.mubr.f32.mxu0 0.0
  %687 = vmatmul.mubr.f32.gmra.mrb[0].mxu0 %v518
  %v688 = vpop.f32.mrb[0].mxu0
  %v689 = vadd.f32 0.0, %v688
  %v690 = vpop.f32.mrb[0].mxu0
  %691 = vmatprep.mubr.f32.mxu0 0.0
  %692 = vmatmul.mubr.f32.gmra.mrb[0].mxu0 %v519
  %v693 = vpop.f32.mrb[0].mxu0
  %v694 = vadd.f32 0.0, %v693
  %v695 = vpop.f32.mrb[0].mxu0
  %696 = vdwg.mxu0
  %v697 = vadd.f32 %v520, %v619
  %v698 = vadd.f32 %v521, %v624
  %v699 = vadd.f32 %v522, %v629
  %v700 = vadd.f32 %v523, %v634
  %v701 = vadd.f32 %v524, %v639
  %v702 = vadd.f32 %v525, %v644
  %v703 = vadd.f32 %v526, %v649
  %v704 = vadd.f32 %v527, %v654
  %v705 = vadd.f32 %v528, %v659
  %v706 = vadd.f32 %v529, %v664
  %v707 = vadd.f32 %v530, %v669
  %v708 = vadd.f32 %v531, %v674
  %v709 = vadd.f32 %v532, %v679
  %v710 = vadd.f32 %v533, %v684
  %v711 = vadd.f32 %v534, %v689
  %v712 = vadd.f32 %v535, %v694
  %713 = vst.msk [vmem:[#allocation2] sm:$0xff] %vm74, %v697
  %714 = vst.msk [vmem:[#allocation2 + $0x8] sm:$0xff] %vm74, %v698
  %715 = vst.msk [vmem:[#allocation2 + $0x10] sm:$0xff] %vm74, %v699
  %716 = vst.msk [vmem:[#allocation2 + $0x18] sm:$0xff] %vm74, %v700
  %717 = vst.msk [vmem:[#allocation2 + $0x20] sm:$0xff] %vm74, %v701
  %718 = vst.msk [vmem:[#allocation2 + $0x28] sm:$0xff] %vm74, %v702
  %719 = vst.msk [vmem:[#allocation2 + $0x30] sm:$0xff] %vm74, %v703
  %720 = vst.msk [vmem:[#allocation2 + $0x38] sm:$0xff] %vm74, %v704
  %721 = vst.msk [vmem:[#allocation2 + $0x40] sm:$0xff] %vm74, %v705
  %722 = vst.msk [vmem:[#allocation2 + $0x48] sm:$0xff] %vm74, %v706
  %723 = vst.msk [vmem:[#allocation2 + $0x50] sm:$0xff] %vm74, %v707
  %724 = vst.msk [vmem:[#allocation2 + $0x58] sm:$0xff] %vm74, %v708
  %725 = vst.msk [vmem:[#allocation2 + $0x60] sm:$0xff] %vm74, %v709
  %726 = vst.msk [vmem:[#allocation2 + $0x68] sm:$0xff] %vm74, %v710
  %727 = vst.msk [vmem:[#allocation2 + $0x70] sm:$0xff] %vm74, %v711
  %728 = vst.msk [vmem:[#allocation2 + $0x78] sm:$0xff] %vm74, %v712
  // Predicated region
  $region34: #{tpu_custom_call.1} parent=0 // pred_check
    %p729 = pneg %p26
  $region35: #{tpu_custom_call.1} parent=0 // pred_check_branch
    %731 = sbr.rel (%p729) target = $region37
  $region36: #{tpu_custom_call.1} parent=0 // pred_region
    %v732 = vld [vmem:[#allocation2] sm:$0xff]
    %v733 = vld [vmem:[#allocation2 + $0x8] sm:$0xff]
    %v734 = vld [vmem:[#allocation2 + $0x10] sm:$0xff]
    %v735 = vld [vmem:[#allocation2 + $0x18] sm:$0xff]
    %v736 = vld [vmem:[#allocation2 + $0x20] sm:$0xff]
    %v737 = vld [vmem:[#allocation2 + $0x28] sm:$0xff]
    %v738 = vld [vmem:[#allocation2 + $0x30] sm:$0xff]
    %v739 = vld [vmem:[#allocation2 + $0x38] sm:$0xff]
    %v740 = vld [vmem:[#allocation2 + $0x40] sm:$0xff]
    %v741 = vld [vmem:[#allocation2 + $0x48] sm:$0xff]
    %v742 = vld [vmem:[#allocation2 + $0x50] sm:$0xff]
    %v743 = vld [vmem:[#allocation2 + $0x58] sm:$0xff]
    %v744 = vld [vmem:[#allocation2 + $0x60] sm:$0xff]
    %v745 = vld [vmem:[#allocation2 + $0x68] sm:$0xff]
    %v746 = vld [vmem:[#allocation2 + $0x70] sm:$0xff]
    %v747 = vld [vmem:[#allocation2 + $0x78] sm:$0xff]
    %v748 = vld [vmem:[%s6] sm:$0x1]
    %v750 = vlaneseq
    %v751 = vshrl.u32 %v750, 7
    %v752 = vsub.s32 0, %v751
    %v753 = vrot.slane %v748, %v752
    %v755 = vadd.f32 %v732, %v753
    %v756 = vadd.f32 %v733, %v753
    %v757 = vadd.f32 %v734, %v753
    %v758 = vadd.f32 %v735, %v753
    %v759 = vadd.f32 %v736, %v753
    %v760 = vadd.f32 %v737, %v753
    %v761 = vadd.f32 %v738, %v753
    %v762 = vadd.f32 %v739, %v753
    %v763 = vadd.f32 %v740, %v753
    %v764 = vadd.f32 %v741, %v753
    %v765 = vadd.f32 %v742, %v753
    %v766 = vadd.f32 %v743, %v753
    %v767 = vadd.f32 %v744, %v753
    %v768 = vadd.f32 %v745, %v753
    %v769 = vadd.f32 %v746, %v753
    %v770 = vadd.f32 %v747, %v753
    %771 = vst.msk [vmem:[%s7] sm:$0xff] %vm74, %v755
    %772 = vst.msk [vmem:[%s7 + $0x8] sm:$0xff] %vm74, %v756
    %773 = vst.msk [vmem:[%s7 + $0x10] sm:$0xff] %vm74, %v757
    %774 = vst.msk [vmem:[%s7 + $0x18] sm:$0xff] %vm74, %v758
    %775 = vst.msk [vmem:[%s7 + $0x20] sm:$0xff] %vm74, %v759
    %776 = vst.msk [vmem:[%s7 + $0x28] sm:$0xff] %vm74, %v760
    %777 = vst.msk [vmem:[%s7 + $0x30] sm:$0xff] %vm74, %v761
    %778 = vst.msk [vmem:[%s7 + $0x38] sm:$0xff] %vm74, %v762
    %779 = vst.msk [vmem:[%s7 + $0x40] sm:$0xff] %vm74, %v763
    %780 = vst.msk [vmem:[%s7 + $0x48] sm:$0xff] %vm74, %v764
    %781 = vst.msk [vmem:[%s7 + $0x50] sm:$0xff] %vm74, %v765
    %782 = vst.msk [vmem:[%s7 + $0x58] sm:$0xff] %vm74, %v766
    %783 = vst.msk [vmem:[%s7 + $0x60] sm:$0xff] %vm74, %v767
    %784 = vst.msk [vmem:[%s7 + $0x68] sm:$0xff] %vm74, %v768
    %785 = vst.msk [vmem:[%s7 + $0x70] sm:$0xff] %vm74, %v769
    %786 = vst.msk [vmem:[%s7 + $0x78] sm:$0xff] %vm74, %v770
  $region37: #{tpu_custom_call.1} parent=0 // pred_fallthru
    _
  // Predicated region
  $region38: #{tpu_custom_call.1} parent=0 // pred_check
    _
  $region39: #{tpu_custom_call.1} parent=0 // pred_check_branch
    %788 = sbr.rel (0) target = $region41
  $region40: #{tpu_custom_call.1} parent=0 // pred_region
    _
  $region41: #{tpu_custom_call.1} parent=0 // pred_fallthru
    _
  // Predicated region
  $region42: #{tpu_custom_call.1} parent=0 // pred_check
    _
  $region43: #{tpu_custom_call.1} parent=0 // pred_check_branch
    %790 = sbr.rel (0) target = $region45
  $region44: #{tpu_custom_call.1} parent=0 // pred_region
    _
  $region45: #{tpu_custom_call.1} parent=0 // pred_fallthru
    _

</llo_original>
